<compile_context>
chip_gen: v6e
topology: v6e:2x2x1
jax: 0.10.0
libtpu: 0.0.40
codegen_flags: <defaults>
</compile_context>

<pallas_src>
import jax
import jax.numpy as jnp
from jax import lax
from jax.experimental import pallas as pl
from jax.experimental.pallas import tpu as pltpu

_LANES = 128                      # vreg lane width
_SUBLANES = 8                     # f32 vreg sublane count
_INNER_ROWS = 512                 # rows per in-kernel chunk (bounds temporaries)
_TILE_BYTES = 2 * 1024 * 1024     # VMEM budget per input per pipeline buffer
_VMEM_LIMIT = 32 * 1024 * 1024    # safe on v5e/v6e (128 MiB) and v7x (64 MiB)


def _round_up(x, m):
    return ((x + m - 1) // m) * m


def _num_tensorcores():
    """2 only on chips exposing two TensorCores to one Pallas call (v7x)."""
    try:
        kind = jax.devices()[0].device_kind.lower()
    except Exception:
        return 1
    return 2 if "v7" in kind else 1


def _as_2d(x):
    """Zero-copy 2-D view: collapse leading dims, keep the last dim whole."""
    if x.ndim <= 1:
        return x.reshape(1, -1)
    if x.ndim == 2:
        return x
    return x.reshape(-1, x.shape[-1])


def _make_bce_kernel(*, tile_rows, inner_rows, n_rows, cols, tiles_total,
                     needs_skip, needs_row_mask):
    """Build the BCE partial-sum kernel, specialized on static tiling params."""
    n_inner = tile_rows // inner_rows
    rows_divide_sublanes = (inner_rows % _SUBLANES) == 0

    def kernel(p_ref, y_ref, acc_ref):
        split = pl.program_id(0)
        tile = pl.program_id(1)
        t_global = split * pl.num_programs(1) + tile

        @pl.when(tile == 0)
        def _init():
            acc_ref[...] = jnp.zeros_like(acc_ref)

        def chunk(j, carry):
            r0 = j * inner_rows
            if not isinstance(r0, int):
                r0 = pl.multiple_of(r0, inner_rows)
            # Cast in-kernel (mirrors .float(); bf16 rides the DMA as bf16).
            p = p_ref[pl.ds(r0, inner_rows), :].astype(jnp.float32)
            y = y_ref[pl.ds(r0, inner_rows), :].astype(jnp.float32)

            # torch.nn.BCELoss clamps each log term at -100 BEFORE the blend.
            log_p = jnp.maximum(jnp.log(p), -100.0)
            log_1mp = jnp.maximum(jnp.log(1.0 - p), -100.0)
            # y*log(p) + (1-y)*log(1-p), refactored to one mul + two adds.
            term = log_1mp + y * (log_p - log_1mp)

            if needs_row_mask:
                # Zero contributions of grid-padding rows in the ragged tile
                # (their DMA'd contents are unspecified).
                row = (t_global * tile_rows + r0
                       + lax.broadcasted_iota(jnp.int32, term.shape, 0))
                term = jnp.where(row < n_rows, term, 0.0)

            if rows_divide_sublanes:
                # Collapse only the leading (non-vreg) axis with VPU adds; the
                # cross-lane/sublane reduce happens once, outside the kernel.
                acc_ref[...] += term.reshape(
                    inner_rows // _SUBLANES, _SUBLANES, cols).sum(axis=0)
            else:
                acc_ref[0:1, :] += jnp.sum(term, axis=0, keepdims=True)
            return carry

        def accumulate():
            if n_inner == 1:
                chunk(0, 0)
            else:
                lax.fori_loop(0, n_inner, chunk, 0)

        if needs_skip:
            # Padded (clamped) tiles of the ragged split division: skip
            # entirely to avoid double counting.
            pl.when(t_global < tiles_total)(accumulate)
        else:
            accumulate()

    return kernel


def mta_loss(conversion_output, conversion_label):
    """Pallas equivalent of MTA_Loss.forward: BCELoss (mean) on probabilities."""
    assert conversion_output.shape == conversion_label.shape
    n = int(conversion_output.size)
    assert n > 0

    p2d = _as_2d(conversion_output)
    y2d = _as_2d(conversion_label)
    n_rows, cols = p2d.shape

    # Sublane packing: block rows must be a multiple of 8 (f32) / 16 (bf16) /
    # 32 (int8), or equal the full row extent.  The smaller itemsize is the
    # stricter constraint.
    isz_p = jnp.dtype(p2d.dtype).itemsize
    isz_y = jnp.dtype(y2d.dtype).itemsize
    row_align = _SUBLANES * max(1, 4 // max(1, min(isz_p, isz_y)))

    # Row-tile size from a VMEM byte budget (2 inputs x 2 buffers stay ~8 MiB).
    lanes = _round_up(cols, _LANES)
    budget_rows = max(row_align, _TILE_BYTES // (lanes * max(isz_p, isz_y)))
    if n_rows <= row_align:
        tile_rows = n_rows                       # full extent -> always legal
    else:
        tile_rows = min(budget_rows, n_rows)
        tile_rows = max(row_align, (tile_rows // row_align) * row_align)
        if tile_rows > _INNER_ROWS:
            tile_rows = (tile_rows // _INNER_ROWS) * _INNER_ROWS
    inner_rows = min(tile_rows, _INNER_ROWS)

    tiles_total = pl.cdiv(n_rows, tile_rows)
    split = max(1, min(_num_tensorcores(), tiles_total))
    tiles_per_split = pl.cdiv(tiles_total, split)
    needs_skip = split * tiles_per_split != tiles_total
    needs_row_mask = (n_rows % tile_rows) != 0
    last_tile = tiles_total - 1

    def in_map(c, i):
        t = c * tiles_per_split + i
        if needs_skip:
            t = jnp.minimum(t, last_tile)        # keep padded-step DMAs in bounds
        return (t, 0)

    kernel = _make_bce_kernel(
        tile_rows=tile_rows, inner_rows=inner_rows, n_rows=n_rows, cols=cols,
        tiles_total=tiles_total, needs_skip=needs_skip,
        needs_row_mask=needs_row_mask)

    cost = pl.CostEstimate(
        flops=8 * n,
        transcendentals=2 * n,
        bytes_accessed=n * (isz_p + isz_y) + split * _SUBLANES * cols * 4)

    partials = pl.pallas_call(
        kernel,
        out_shape=jax.ShapeDtypeStruct((split * _SUBLANES, cols), jnp.float32),
        grid_spec=pltpu.PrefetchScalarGridSpec(
            num_scalar_prefetch=0,
            grid=(split, tiles_per_split),
            in_specs=[
                pl.BlockSpec((tile_rows, cols), in_map),
                pl.BlockSpec((tile_rows, cols), in_map),
            ],
            # One (8, cols) accumulator block per split; block index is constant
            # across the reduction axis -> output stays resident in VMEM.
            out_specs=pl.BlockSpec((_SUBLANES, cols), lambda c, i: (c, 0)),
        ),
        compiler_params=pltpu.CompilerParams(
            dimension_semantics=("parallel", "arbitrary"),
            vmem_limit_bytes=_VMEM_LIMIT,
        ),
        cost_estimate=cost,
    )(p2d, y2d)

    # Tiny finalize in XLA: reduce per-split vreg-shaped partial sums, -1/N scale.
    return jnp.sum(partials) * (-1.0 / n)


def _bce_ref(p, y):
    """Pure-JAX reference with torch.nn.BCELoss semantics (mean, -100 clamp)."""
    p = p.astype(jnp.float32)
    y = y.astype(jnp.float32)
    log_p = jnp.maximum(jnp.log(p), -100.0)
    log_1mp = jnp.maximum(jnp.log(1.0 - p), -100.0)
    return -jnp.mean(y * log_p + (1.0 - y) * log_1mp)


if __name__ == "__main__":
    key = jax.random.PRNGKey(0)
    k1, k2, k3, k4, k5, k6 = jax.random.split(key, 6)

    # --- Small deterministic example: batch=8, 16 conversion probs each. ---
    batch, feat = 8, 16
    conversion_output = jax.nn.sigmoid(
        jax.random.normal(k1, (batch, feat), dtype=jnp.float32))
    conversion_label = jax.random.bernoulli(
        k2, 0.3, (batch, feat)).astype(jnp.float32)
    loss = mta_loss(conversion_output, conversion_label)
    jax.block_until_ready(loss)
    ref = _bce_ref(conversion_output, conversion_label)
    assert jnp.allclose(loss, ref, rtol=1e-5, atol=1e-6), (loss, ref)

    # --- Multi-tile path: ragged last row tile (in-kernel mask) + last dim
    #     that is not a multiple of 128 (full-extent lane block). ---
    p2 = jax.nn.sigmoid(jax.random.normal(k3, (1000, 160), dtype=jnp.float32))
    y2 = jax.random.bernoulli(k4, 0.5, (1000, 160)).astype(jnp.float32)
    loss2 = mta_loss(p2, y2)
    jax.block_until_ready(loss2)
    ref2 = _bce_ref(p2, y2)
    assert jnp.allclose(loss2, ref2, rtol=1e-4, atol=1e-6), (loss2, ref2)

    # --- bf16 inputs ride the DMA as bf16; upcast to f32 happens in-kernel. ---
    p3 = conversion_output.astype(jnp.bfloat16)
    y3 = conversion_label.astype(jnp.bfloat16)
    loss3 = mta_loss(p3, y3)
    jax.block_until_ready(loss3)
    ref3 = _bce_ref(p3, y3)
    assert jnp.allclose(loss3, ref3, rtol=1e-4, atol=1e-6), (loss3, ref3)

    # --- 1-D inputs (one conversion probability per example). ---
    p4 = jax.nn.sigmoid(jax.random.normal(k5, (100,), dtype=jnp.float32))
    y4 = jax.random.bernoulli(k6, 0.5, (100,)).astype(jnp.float32)
    loss4 = mta_loss(p4, y4)
    jax.block_until_ready(loss4)
    ref4 = _bce_ref(p4, y4)
    assert jnp.allclose(loss4, ref4, rtol=1e-5, atol=1e-6), (loss4, ref4)

    print("KERNEL_OK")
</pallas_src>

<mosaic_0001>
module attributes {stable_mosaic.version = 11 : i64} {
  func.func @kernel(%arg0: i32, %arg1: i32, %arg2: memref<8x16xf32, #tpu.memory_space<vmem>>, %arg3: memref<8x16xf32, #tpu.memory_space<vmem>>, %arg4: memref<8x16xf32, #tpu.memory_space<vmem>>) attributes {dimension_semantics = [#tpu.dimension_semantics<parallel>, #tpu.dimension_semantics<arbitrary>], iteration_bounds = array<i64: 1, 1>, scalar_prefetch = 0 : i64, scratch_operands = 0 : i64, tpu.core_type = #tpu.core_type<tc>, window_params = [{transform_indices = @transform_0, window_bounds = array<i64: 8, 16>}, {transform_indices = @transform_1, window_bounds = array<i64: 8, 16>}, {transform_indices = @transform_2, window_bounds = array<i64: 8, 16>}]} {
    %c0_i32 = arith.constant 0 : i32
    %0 = arith.cmpi eq, %arg1, %c0_i32 : i32
    %1 = arith.extui %0 : i1 to i32
    %c0_i32_0 = arith.constant 0 : i32
    %2 = arith.cmpi ne, %1, %c0_i32_0 : i32
    scf.if %2 {
      %cst_11 = arith.constant 0.000000e+00 : f32
      %21 = vector.broadcast %cst_11 : f32 to vector<8x16xf32>
      %c0_12 = arith.constant 0 : index
      %c0_13 = arith.constant 0 : index
      %22 = vector.load %arg4[%c0_12, %c0_13] : memref<8x16xf32, #tpu.memory_space<vmem>>, vector<8x16xf32>
      tpu.vector_store %arg4[%c0_12, %c0_13], %21 {strides = array<i32>} : memref<8x16xf32, #tpu.memory_space<vmem>>, vector<8x16xf32>,
    } else {
    }
    %c0 = arith.constant 0 : index
    %c0_1 = arith.constant 0 : index
    %3 = vector.load %arg2[%c0, %c0_1] : memref<8x16xf32, #tpu.memory_space<vmem>>, vector<8x16xf32>
    %c0_2 = arith.constant 0 : index
    %c0_3 = arith.constant 0 : index
    %4 = vector.load %arg3[%c0_2, %c0_3] : memref<8x16xf32, #tpu.memory_space<vmem>>, vector<8x16xf32>
    %5 = math.log %3 : vector<8x16xf32>
    %cst = arith.constant -1.000000e+02 : f32
    %6 = vector.broadcast %cst : f32 to vector<8x16xf32>
    %7 = arith.maximumf %5, %6 : vector<8x16xf32>
    %cst_4 = arith.constant 1.000000e+00 : f32
    %8 = vector.broadcast %cst_4 : f32 to vector<8x16xf32>
    %9 = arith.subf %8, %3 : vector<8x16xf32>
    %10 = math.log %9 : vector<8x16xf32>
    %cst_5 = arith.constant -1.000000e+02 : f32
    %11 = vector.broadcast %cst_5 : f32 to vector<8x16xf32>
    %12 = arith.maximumf %10, %11 : vector<8x16xf32>
    %13 = arith.subf %7, %12 : vector<8x16xf32>
    %14 = arith.mulf %4, %13 : vector<8x16xf32>
    %15 = arith.addf %12, %14 : vector<8x16xf32>
    %c0_6 = arith.constant 0 : index
    %c0_7 = arith.constant 0 : index
    %16 = vector.load %arg4[%c0_6, %c0_7] : memref<8x16xf32, #tpu.memory_space<vmem>>, vector<8x16xf32>
    %17 = vector.shape_cast %15 : vector<8x16xf32> to vector<1x8x16xf32>
    %cst_8 = arith.constant dense<0.000000e+00> : vector<8x16xf32>
    %18 = vector.multi_reduction <add>, %17, %cst_8 [0] : vector<1x8x16xf32> to vector<8x16xf32>
    %19 = arith.addf %16, %18 : vector<8x16xf32>
    %c0_9 = arith.constant 0 : index
    %c0_10 = arith.constant 0 : index
    %20 = vector.load %arg4[%c0_9, %c0_10] : memref<8x16xf32, #tpu.memory_space<vmem>>, vector<8x16xf32>
    tpu.vector_store %arg4[%c0_9, %c0_10], %19 {strides = array<i32>} : memref<8x16xf32, #tpu.memory_space<vmem>>, vector<8x16xf32>,
    return
  }
  func.func @transform_0(%arg0: i32, %arg1: i32) -> (i32, i32) {
    %c1_i32 = arith.constant 1 : i32
    %0 = arith.muli %arg0, %c1_i32 : i32
    %1 = arith.addi %0, %arg1 : i32
    %c0_i32 = arith.constant 0 : i32
    %c0_i32_0 = arith.constant 0 : i32
    return %1, %c0_i32 : i32, i32
  }
  func.func @transform_1(%arg0: i32, %arg1: i32) -> (i32, i32) {
    %c1_i32 = arith.constant 1 : i32
    %0 = arith.muli %arg0, %c1_i32 : i32
    %1 = arith.addi %0, %arg1 : i32
    %c0_i32 = arith.constant 0 : i32
    %c0_i32_0 = arith.constant 0 : i32
    return %1, %c0_i32 : i32, i32
  }
  func.func @transform_2(%arg0: i32, %arg1: i32) -> (i32, i32) {
    %c0_i32 = arith.constant 0 : i32
    %c0_i32_0 = arith.constant 0 : i32
    return %arg0, %c0_i32 : i32, i32
  }
}

</mosaic_0001>

<llo_original>
// kernel: tpu_custom_call.1
$region0: #{tpu_custom_call.1}
  #allocation0 [shape = 'u32[]', space=smem, size = 0x4, offset = 0x4, fixed_abs, tag = 'smem constant byte address 0x4 - core index']
  #allocation1 [shape = 'u32[144,128]{1,0:T(1,128)}', space=vmem, size = 0x12000, scoped, tag = 'internal scratch']
  %s0 = inlined_call_operand.hbm [shape: f32[8,16], index: 0, kind: input, shape index: {}]
  %s1 = inlined_call_operand.hbm [shape: f32[8,16], index: 1, kind: input, shape index: {}]
  %s2 = inlined_call_operand.hbm [shape: f32[8,16], index: 2, kind: output, shape index: {}]
  %s3 = sld [smem:[#allocation0]]
  $region30: #{tpu_custom_call.1} parent=0
    _
  %s5 = ssub.s32 1, %s3
  %s6 = scalar_select 0, %s5, %s3
  $region1: #{tpu_custom_call.1} parent=0
    #allocation2 [shape = 'u8[4096]{0}', space=vmem, size = 0x1000, scoped, tag = 'input window, operand 0, single buffered']
    #allocation3 [shape = 's32[1]{0}', space=sflag, size = 0x4, scoped, tag = 'scoped memory for tpu_custom_call.1']
    #allocation4 [shape = 's32[1]{0}', space=sflag, size = 0x4, scoped, tag = 'scoped memory for tpu_custom_call.1']
    #allocation5 [shape = 'u8[4096]{0}', space=vmem, size = 0x1000, scoped, tag = 'input window, operand 1, single buffered']
    #allocation6 [shape = 's32[1]{0}', space=sflag, size = 0x4, scoped, tag = 'scoped memory for tpu_custom_call.1']
    #allocation7 [shape = 'u8[4096]{0}', space=vmem, size = 0x1000, scoped, tag = 'output window, operand 0, single buffered']
    %7 = vsyncpa [#allocation3], 0
    %8 = vsyncpa [#allocation6], 0
    %9 = vsyncpa [#allocation4], 0
    // Predicated region
    $region2: #{tpu_custom_call.1} parent=1 // pred_check
      _
    $region3: #{tpu_custom_call.1} parent=1 // pred_check_branch
      %11 = sbr.rel (0) target = $region5
    $region4: #{tpu_custom_call.1} parent=1 // pred_region
      %s12 = sadd.s32 0, 0
      %s14 = ssub.s32 128, 128
      %15 = vsyncadd [#allocation3], %s14
      %s16 = smul.addr %s12, 128
      %s17 = scalar_lea.hbm %s0, %s16
      %s19 = sshll.u32 [#allocation2], 4
      %s20 = int_to_ptr.vmem [resolvable:$true] %s19
      %22 = dma.hbm_to_vmem [thread:$0]  %s17, 128, %s20, [#allocation3]
    $region5: #{tpu_custom_call.1} parent=1 // pred_fallthru
      _
    // Predicated region
    $region6: #{tpu_custom_call.1} parent=1 // pred_check
      _
    $region7: #{tpu_custom_call.1} parent=1 // pred_check_branch
      %24 = sbr.rel (0) target = $region9
    $region8: #{tpu_custom_call.1} parent=1 // pred_region
      %s25 = sadd.s32 0, 0
      %s27 = ssub.s32 128, 128
      %28 = vsyncadd [#allocation6], %s27
      %s29 = smul.addr %s25, 128
      %s30 = scalar_lea.hbm %s1, %s29
      %s32 = sshll.u32 [#allocation5], 4
      %s33 = int_to_ptr.vmem [resolvable:$true] %s32
      %35 = dma.hbm_to_vmem [thread:$0]  %s30, 128, %s33, [#allocation6]
    $region9: #{tpu_custom_call.1} parent=1 // pred_fallthru
      _
    // Predicated region
    $region10: #{tpu_custom_call.1} parent=1 // pred_check
      _
    $region11: #{tpu_custom_call.1} parent=1 // pred_check_branch
      %37 = sbr.rel (0) target = $region13
    $region12: #{tpu_custom_call.1} parent=1 // pred_region
      %38 = dma.done [#allocation3], 128
    $region13: #{tpu_custom_call.1} parent=1 // pred_fallthru
      _
    // Predicated region
    $region14: #{tpu_custom_call.1} parent=1 // pred_check
      _
    $region15: #{tpu_custom_call.1} parent=1 // pred_check_branch
      %40 = sbr.rel (0) target = $region17
    $region16: #{tpu_custom_call.1} parent=1 // pred_region
      %41 = dma.done [#allocation6], 128
    $region17: #{tpu_custom_call.1} parent=1 // pred_fallthru
      _
    %s42 = sadd.s32 0, 0
    %s43 = sadd.s32 0, 0
    %p44 = scmp.eq.s32.totalorder 0, 0
    // Predicated region
    $region18: #{tpu_custom_call.1} parent=1 // pred_check
      %p45 = pneg %p44
    $region19: #{tpu_custom_call.1} parent=1 // pred_check_branch
      %47 = sbr.rel (%p45) target = $region21
    $region20: #{tpu_custom_call.1} parent=1 // pred_region
      %vm48 = vcmask 130048
      %49 = vst.msk [vmem:[#allocation7] sm:$0xff] %vm48, 0.0
    $region21: #{tpu_custom_call.1} parent=1 // pred_fallthru
      _
    %v50 = vld [vmem:[#allocation2] sm:$0xff]
    %v51 = vld [vmem:[#allocation5] sm:$0xff]
    %v52 = vlog2.pop %v50
    %v53 = vmul.f32 %v52, 0.6931472
    %v54 = vmax.f32 %v53, -100.0
    %v55 = vsub.f32 1.0, %v50
    %v56 = vlog2.pop %v55
    %v57 = vmul.f32 %v56, 0.6931472
    %v58 = vmax.f32 %v57, -100.0
    %v59 = vsub.f32 %v54, %v58
    %v60 = vmul.f32 %v51, %v59
    %v61 = vadd.f32 %v58, %v60
    %v62 = vld [vmem:[#allocation7] sm:$0xff]
    %v63 = vadd.f32 %v61, 0.0
    %v64 = vadd.f32 %v62, %v63
    %vm65 = vcmask 130048
    %66 = vst.msk [vmem:[#allocation7] sm:$0xff] %vm65, %v64
    // Predicated region
    $region22: #{tpu_custom_call.1} parent=1 // pred_check
      _
    $region23: #{tpu_custom_call.1} parent=1 // pred_check_branch
      %68 = sbr.rel (0) target = $region25
    $region24: #{tpu_custom_call.1} parent=1 // pred_region
      %s70 = ssub.s32 128, 128
      %71 = vsyncadd [#allocation4], %s70
      %s73 = sshll.u32 [#allocation7], 4
      %s74 = int_to_ptr.vmem [resolvable:$true] %s73
      %76 = dma.vmem_to_hbm [thread:$0]  %s74, 128, %s2, [#allocation4]
    $region25: #{tpu_custom_call.1} parent=1 // pred_fallthru
      _
    // Predicated region
    $region26: #{tpu_custom_call.1} parent=1 // pred_check
      _
    $region27: #{tpu_custom_call.1} parent=1 // pred_check_branch
      %78 = sbr.rel (0) target = $region29
    $region28: #{tpu_custom_call.1} parent=1 // pred_region
      %79 = dma.done [#allocation4], 128
    $region29: #{tpu_custom_call.1} parent=1 // pred_fallthru
      _
    %80 = vsyncpa [#allocation3], 1
    %81 = vsyncpa [#allocation6], 1
    %82 = vsyncpa [#allocation4], 1

</llo_original>
